<compile_context>
chip_gen: v7x
topology: tpu7x:2x2x1
jax: 0.10.0
libtpu: 0.0.40
codegen_flags: <defaults>
</compile_context>

<pallas_src>
import jax
import jax.numpy as jnp
from jax.experimental import pallas as pl
from jax.experimental.pallas import tpu as pltpu

IN_FEATURES = 50
OUT_FEATURES = 1250
K_PAD = 64  # 50 features + 1 bias row + zero padding -> clean sublane layout


def _linear_sigmoid_kernel(x_ref, w_ref, o_ref):
    # MXU matmul (bf16 in, f32 accumulation) + sigmoid (EUP). Bias is already
    # folded into row IN_FEATURES of w_ref / the constant-1 column of x_ref.
    acc = jnp.dot(x_ref[...], w_ref[...], preferred_element_type=jnp.float32)
    o_ref[...] = jax.nn.sigmoid(acc).astype(o_ref.dtype)


def prepare_params(w, b):
    """One-time parameter prep (hoisted out of the per-call path).

    w: (1250, 50) f32 (PyTorch layout), b: (1250,) f32
    returns: (64, 1250) bf16 weight with the bias folded into row 50
             (rows 51..63 are zero).
    """
    w_t = jnp.transpose(w)                                    # (50, 1250)
    w_aug = jnp.concatenate([w_t, b[None, :]], axis=0)        # (51, 1250)
    w_aug = jnp.pad(w_aug, ((0, K_PAD - (IN_FEATURES + 1)), (0, 0)))
    return w_aug.astype(jnp.bfloat16)                         # (64, 1250)


@jax.jit
def simple1nn_forward(x, w_prepped):
    """sigmoid(x @ w.T + b) using the prepped weight from prepare_params()."""
    B, K = x.shape
    assert K == IN_FEATURES

    # Cheap per-call prep: append the bias column (1.0), zero-pad K to 64,
    # cast to bf16 (halves the activation DMA; accumulation stays f32).
    ones = jnp.ones((B, 1), x.dtype)
    x_aug = jnp.concatenate([x, ones], axis=1)                        # (B, 51)
    x_aug = jnp.pad(x_aug, ((0, 0), (0, K_PAD - (IN_FEATURES + 1))))  # (B, 64)
    x_aug = x_aug.astype(jnp.bfloat16)

    cost = pl.CostEstimate(
        flops=2 * B * K_PAD * OUT_FEATURES,
        transcendentals=B * OUT_FEATURES,
        bytes_accessed=(x_aug.size * 2 + w_prepped.size * 2
                        + B * OUT_FEATURES * 4),
    )

    return pl.pallas_call(
        _linear_sigmoid_kernel,
        out_shape=jax.ShapeDtypeStruct((B, OUT_FEATURES), jnp.float32),
        # Whole problem is ~0.3 MiB (>>100x VMEM headroom even on v7x), so a
        # single grid step with everything resident is the minimum-latency shape.
        grid=(1,),
        in_specs=[
            pl.BlockSpec((B, K_PAD), lambda i: (0, 0)),             # activations
            pl.BlockSpec((K_PAD, OUT_FEATURES), lambda i: (0, 0)),  # weight+bias
        ],
        out_specs=pl.BlockSpec((B, OUT_FEATURES), lambda i: (0, 0)),
        compiler_params=pltpu.CompilerParams(
            dimension_semantics=("arbitrary",),
        ),
        cost_estimate=cost,
    )(x_aug, w_prepped)


if __name__ == "__main__":
    key = jax.random.PRNGKey(0)
    k_x, k_w, k_b = jax.random.split(key, 3)

    B = 8

    # Deterministic init mimicking nn.Linear default: U(-1/sqrt(IN), 1/sqrt(IN)).
    bound = 1.0 / jnp.sqrt(jnp.float32(IN_FEATURES))
    w = jax.random.uniform(k_w, (OUT_FEATURES, IN_FEATURES), jnp.float32,
                           minval=-bound, maxval=bound)
    b = jax.random.uniform(k_b, (OUT_FEATURES,), jnp.float32,
                           minval=-bound, maxval=bound)
    x = jax.random.normal(k_x, (B, IN_FEATURES), jnp.float32)

    # One-time parameter prep (would live in the module's __init__).
    w_prepped = jax.block_until_ready(prepare_params(w, b))

    out = simple1nn_forward(x, w_prepped)
    out = jax.block_until_ready(out)
    assert out.shape == (B, OUT_FEATURES)

    # Reference 1: bf16-consistent (same quantization of x, w, and folded bias
    # as the kernel inputs).
    xb = x.astype(jnp.bfloat16).astype(jnp.float32)
    wb = w.astype(jnp.bfloat16).astype(jnp.float32)
    bb = b.astype(jnp.bfloat16).astype(jnp.float32)
    ref_bf16 = jax.nn.sigmoid(xb @ wb.T + bb[None, :])
    assert jnp.allclose(out, ref_bf16, atol=2e-3, rtol=2e-3)

    # Reference 2: full-f32 reference; bf16 inputs keep the error tiny for K=50.
    ref_f32 = jax.nn.sigmoid(x @ w.T + b[None, :])
    assert jnp.allclose(out, ref_f32, atol=2e-2, rtol=2e-2)

    print("KERNEL_OK")
</pallas_src>

<mosaic_0001>
module attributes {stable_mosaic.version = 11 : i64} {
  func.func @_linear_sigmoid_kernel(%arg0: i32, %arg1: memref<8x64xbf16, #tpu.memory_space<vmem>>, %arg2: memref<64x1250xbf16, #tpu.memory_space<vmem>>, %arg3: memref<8x1250xf32, #tpu.memory_space<vmem>>) attributes {dimension_semantics = [#tpu.dimension_semantics<arbitrary>], iteration_bounds = array<i64: 1>, scalar_prefetch = 0 : i64, scratch_operands = 0 : i64, tpu.core_type = #tpu.core_type<tc>, window_params = [{pipeline_mode = #tpu.pipeline_mode<synchronous>, transform_indices = @transform_0, window_bounds = array<i64: 8, 64>}, {pipeline_mode = #tpu.pipeline_mode<synchronous>, transform_indices = @transform_1, window_bounds = array<i64: 64, 1250>}, {pipeline_mode = #tpu.pipeline_mode<synchronous>, transform_indices = @transform_2, window_bounds = array<i64: 8, 1250>}]} {
    %c0 = arith.constant 0 : index
    %c0_0 = arith.constant 0 : index
    %0 = vector.load %arg1[%c0, %c0_0] : memref<8x64xbf16, #tpu.memory_space<vmem>>, vector<8x64xbf16>
    %c0_1 = arith.constant 0 : index
    %c0_2 = arith.constant 0 : index
    %1 = vector.load %arg2[%c0_1, %c0_2] : memref<64x1250xbf16, #tpu.memory_space<vmem>>, vector<64x1250xbf16>
    %cst = arith.constant dense<0.000000e+00> : vector<8x1250xf32>
    %2 = tpu.matmul %0, %1, %cst {dimension_numbers = #tpu.dot_dimension_numbers<[1], [0], [0], [1], [0, 0, 1, 1], [], []>} : vector<8x64xbf16>, vector<64x1250xbf16>, vector<8x1250xf32> -> vector<8x1250xf32>
    %3 = arith.negf %2 : vector<8x1250xf32>
    %4 = math.exp %3 : vector<8x1250xf32>
    %cst_3 = arith.constant 1.000000e+00 : f32
    %5 = vector.broadcast %cst_3 : f32 to vector<8x1250xf32>
    %6 = arith.addf %5, %4 : vector<8x1250xf32>
    %7 = arith.divf %5, %6 : vector<8x1250xf32>
    %c0_4 = arith.constant 0 : index
    %c0_5 = arith.constant 0 : index
    %8 = vector.load %arg3[%c0_4, %c0_5] : memref<8x1250xf32, #tpu.memory_space<vmem>>, vector<8x1250xf32>
    tpu.vector_store %arg3[%c0_4, %c0_5], %7 {strides = array<i32>} : memref<8x1250xf32, #tpu.memory_space<vmem>>, vector<8x1250xf32>,
    return
  }
  func.func @transform_0(%arg0: i32) -> (i32, i32) {
    %c0_i32 = arith.constant 0 : i32
    %c0_i32_0 = arith.constant 0 : i32
    %c0_i32_1 = arith.constant 0 : i32
    return %c0_i32, %c0_i32_0 : i32, i32
  }
  func.func @transform_1(%arg0: i32) -> (i32, i32) {
    %c0_i32 = arith.constant 0 : i32
    %c0_i32_0 = arith.constant 0 : i32
    %c0_i32_1 = arith.constant 0 : i32
    return %c0_i32, %c0_i32_0 : i32, i32
  }
  func.func @transform_2(%arg0: i32) -> (i32, i32) {
    %c0_i32 = arith.constant 0 : i32
    %c0_i32_0 = arith.constant 0 : i32
    %c0_i32_1 = arith.constant 0 : i32
    return %c0_i32, %c0_i32_0 : i32, i32
  }
}

</mosaic_0001>

<llo_original>
// kernel: simple1nn_forward.1
$region0: #{simple1nn_forward.1}
  #allocation0 [shape = 'u32[]', space=smem, size = 0x4, offset = 0x4, fixed_abs, tag = 'smem constant byte address 0x4 - core index']
  #allocation1 [shape = 'u32[144,128]{1,0:T(1,128)}', space=vmem, size = 0x12000, scoped, tag = 'internal scratch']
  %s0 = inlined_call_operand.vmem [shape: bf16[8,64], index: 0, kind: input, shape index: {}]
  %s1 = inlined_call_operand.hbm [shape: bf16[64,1250], index: 1, kind: input, shape index: {}]
  %s2 = inlined_call_operand.hbm [shape: f32[8,1250], index: 2, kind: output, shape index: {}]
  %s3 = sld [smem:[#allocation0]]
  $region22: #{simple1nn_forward.1} parent=0
    _
  %s5 = ssub.s32 1, %s3
  %s6 = scalar_select 0, %s5, %s3
  $region1: #{simple1nn_forward.1} parent=0
    #allocation2 [shape = 'u8[163840]{0}', space=vmem, size = 0x28000, scoped, tag = 'input window, operand 1, single buffered']
    #allocation3 [shape = 's32[1]{0}', space=sflag, size = 0x4, scoped, tag = 'scoped memory for simple1nn_forward.1']
    #allocation4 [shape = 's32[1]{0}', space=sflag, size = 0x4, scoped, tag = 'scoped memory for simple1nn_forward.1']
    #allocation5 [shape = 'u8[40960]{0}', space=vmem, size = 0xa000, scoped, tag = 'output window, operand 0, single buffered']
    %7 = vsyncpa [#allocation3], 0
    %8 = vsyncpa [#allocation4], 0
    // Predicated region
    $region2: #{simple1nn_forward.1} parent=1 // pred_check
      _
    $region3: #{simple1nn_forward.1} parent=1 // pred_check_branch
      %10 = sbr.rel (0) target = $region5
    $region4: #{simple1nn_forward.1} parent=1 // pred_region
      _
    $region5: #{simple1nn_forward.1} parent=1 // pred_fallthru
      _
    // Predicated region
    $region6: #{simple1nn_forward.1} parent=1 // pred_check
      _
    $region7: #{simple1nn_forward.1} parent=1 // pred_check_branch
      %12 = sbr.rel (0) target = $region9
    $region8: #{simple1nn_forward.1} parent=1 // pred_region
      %s14 = ssub.s32 5120, 5120
      %15 = vsyncadd [#allocation3], %s14
      %s16 = sshll.u32 [#allocation2], 4
      %s17 = int_to_ptr.vmem [resolvable:$true] %s16
      %22 = dma.hbm_to_vmem [thread:$0]  %s1, 5120, %s17, [#allocation3], 640, 640, 40
    $region9: #{simple1nn_forward.1} parent=1 // pred_fallthru
      _
    // Predicated region
    $region10: #{simple1nn_forward.1} parent=1 // pred_check
      _
    $region11: #{simple1nn_forward.1} parent=1 // pred_check_branch
      %24 = sbr.rel (0) target = $region13
    $region12: #{simple1nn_forward.1} parent=1 // pred_region
      %25 = dma.done [#allocation3], 5120
    $region13: #{simple1nn_forward.1} parent=1 // pred_fallthru
      _
    %v27 = vld [vmem:[%s0] sm:$0xf]
    %v28 = vld [vmem:[#allocation2] sm:$0xff]
    %v29 = vld [vmem:[#allocation2 + $0x8] sm:$0xff]
    %v30 = vld [vmem:[#allocation2 + $0x10] sm:$0xff]
    %v31 = vld [vmem:[#allocation2 + $0x18] sm:$0xff]
    %v32 = vld [vmem:[#allocation2 + $0x20] sm:$0xff]
    %v33 = vld [vmem:[#allocation2 + $0x28] sm:$0xff]
    %v34 = vld [vmem:[#allocation2 + $0x30] sm:$0xff]
    %v35 = vld [vmem:[#allocation2 + $0x38] sm:$0xff]
    %v36 = vld [vmem:[#allocation2 + $0x40] sm:$0xff]
    %v37 = vld [vmem:[#allocation2 + $0x48] sm:$0xff]
    %v38 = vld [vmem:[#allocation2 + $0x50] sm:$0xff]
    %v39 = vld [vmem:[#allocation2 + $0x58] sm:$0xff]
    %v40 = vld [vmem:[#allocation2 + $0x60] sm:$0xff]
    %v41 = vld [vmem:[#allocation2 + $0x68] sm:$0xff]
    %v42 = vld [vmem:[#allocation2 + $0x70] sm:$0xff]
    %v43 = vld [vmem:[#allocation2 + $0x78] sm:$0xff]
    %v44 = vld [vmem:[#allocation2 + $0x80] sm:$0xff]
    %v45 = vld [vmem:[#allocation2 + $0x88] sm:$0xff]
    %v46 = vld [vmem:[#allocation2 + $0x90] sm:$0xff]
    %v47 = vld [vmem:[#allocation2 + $0x98] sm:$0xff]
    %v48 = vld [vmem:[#allocation2 + $0xa0] sm:$0xff]
    %v49 = vld [vmem:[#allocation2 + $0xa8] sm:$0xff]
    %v50 = vld [vmem:[#allocation2 + $0xb0] sm:$0xff]
    %v51 = vld [vmem:[#allocation2 + $0xb8] sm:$0xff]
    %v52 = vld [vmem:[#allocation2 + $0xc0] sm:$0xff]
    %v53 = vld [vmem:[#allocation2 + $0xc8] sm:$0xff]
    %v54 = vld [vmem:[#allocation2 + $0xd0] sm:$0xff]
    %v55 = vld [vmem:[#allocation2 + $0xd8] sm:$0xff]
    %v56 = vld [vmem:[#allocation2 + $0xe0] sm:$0xff]
    %v57 = vld [vmem:[#allocation2 + $0xe8] sm:$0xff]
    %v58 = vld [vmem:[#allocation2 + $0xf0] sm:$0xff]
    %v59 = vld [vmem:[#allocation2 + $0xf8] sm:$0xff]
    %v60 = vld [vmem:[#allocation2 + $0x100] sm:$0xff]
    %v61 = vld [vmem:[#allocation2 + $0x108] sm:$0xff]
    %v62 = vld [vmem:[#allocation2 + $0x110] sm:$0xff]
    %v63 = vld [vmem:[#allocation2 + $0x118] sm:$0xff]
    %v64 = vld [vmem:[#allocation2 + $0x120] sm:$0xff]
    %v65 = vld [vmem:[#allocation2 + $0x128] sm:$0xff]
    %v66 = vld [vmem:[#allocation2 + $0x130] sm:$0xff]
    %v67 = vld [vmem:[#allocation2 + $0x138] sm:$0xff]
    %v108 = vunpack.c.l.b16 %v28
    %v109 = vunpack.c.h.b16 %v28
    %v110 = vunpack.c.l.b16 %v29
    %v111 = vunpack.c.h.b16 %v29
    %v112 = vunpack.c.l.b16 %v30
    %v113 = vunpack.c.h.b16 %v30
    %v114 = vunpack.c.l.b16 %v31
    %v115 = vunpack.c.h.b16 %v31
    %v116 = vunpack.c.l.b16 %v32
    %v117 = vunpack.c.h.b16 %v32
    %v118 = vunpack.c.l.b16 %v33
    %v119 = vunpack.c.h.b16 %v33
    %v120 = vunpack.c.l.b16 %v34
    %v121 = vunpack.c.h.b16 %v34
    %v122 = vunpack.c.l.b16 %v35
    %v123 = vunpack.c.h.b16 %v35
    %v124 = vunpack.c.l.b16 %v36
    %v125 = vunpack.c.h.b16 %v36
    %v126 = vunpack.c.l.b16 %v37
    %v127 = vunpack.c.h.b16 %v37
    %v128 = vunpack.c.l.b16 %v38
    %v129 = vunpack.c.h.b16 %v38
    %v130 = vunpack.c.l.b16 %v39
    %v131 = vunpack.c.h.b16 %v39
    %v132 = vunpack.c.l.b16 %v40
    %v133 = vunpack.c.h.b16 %v40
    %v134 = vunpack.c.l.b16 %v41
    %v135 = vunpack.c.h.b16 %v41
    %v136 = vunpack.c.l.b16 %v42
    %v137 = vunpack.c.h.b16 %v42
    %v138 = vunpack.c.l.b16 %v43
    %v139 = vunpack.c.h.b16 %v43
    %v140 = vunpack.c.l.b16 %v44
    %v141 = vunpack.c.h.b16 %v44
    %v142 = vunpack.c.l.b16 %v45
    %v143 = vunpack.c.h.b16 %v45
    %v144 = vunpack.c.l.b16 %v46
    %v145 = vunpack.c.h.b16 %v46
    %v146 = vunpack.c.l.b16 %v47
    %v147 = vunpack.c.h.b16 %v47
    %v148 = vunpack.c.l.b16 %v48
    %v149 = vunpack.c.h.b16 %v48
    %v150 = vunpack.c.l.b16 %v49
    %v151 = vunpack.c.h.b16 %v49
    %v152 = vunpack.c.l.b16 %v50
    %v153 = vunpack.c.h.b16 %v50
    %v154 = vunpack.c.l.b16 %v51
    %v155 = vunpack.c.h.b16 %v51
    %v156 = vunpack.c.l.b16 %v52
    %v157 = vunpack.c.h.b16 %v52
    %v158 = vunpack.c.l.b16 %v53
    %v159 = vunpack.c.h.b16 %v53
    %v160 = vunpack.c.l.b16 %v54
    %v161 = vunpack.c.h.b16 %v54
    %v162 = vunpack.c.l.b16 %v55
    %v163 = vunpack.c.h.b16 %v55
    %v164 = vunpack.c.l.b16 %v56
    %v165 = vunpack.c.h.b16 %v56
    %v166 = vunpack.c.l.b16 %v57
    %v167 = vunpack.c.h.b16 %v57
    %v168 = vunpack.c.l.b16 %v58
    %v169 = vunpack.c.h.b16 %v58
    %v170 = vunpack.c.l.b16 %v59
    %v171 = vunpack.c.h.b16 %v59
    %v172 = vunpack.c.l.b16 %v60
    %v173 = vunpack.c.h.b16 %v60
    %v174 = vunpack.c.l.b16 %v61
    %v175 = vunpack.c.h.b16 %v61
    %v176 = vunpack.c.l.b16 %v62
    %v177 = vunpack.c.h.b16 %v62
    %v178 = vunpack.c.l.b16 %v63
    %v179 = vunpack.c.h.b16 %v63
    %v180 = vunpack.c.l.b16 %v64
    %v181 = vunpack.c.h.b16 %v64
    %v182 = vunpack.c.l.b16 %v65
    %v183 = vunpack.c.h.b16 %v65
    %v184 = vunpack.c.l.b16 %v66
    %v185 = vunpack.c.h.b16 %v66
    %v186 = vunpack.c.l.b16 %v67
    %v187 = vunpack.c.h.b16 %v67
    %v188 = vpack.c.b16 %v118, %v108
    %v189 = vpack.c.b16 %v119, %v109
    %v190 = vpack.c.b16 %v120, %v110
    %v191 = vpack.c.b16 %v121, %v111
    %v192 = vpack.c.b16 %v122, %v112
    %v193 = vpack.c.b16 %v123, %v113
    %v194 = vpack.c.b16 %v124, %v114
    %v195 = vpack.c.b16 %v125, %v115
    %v196 = vpack.c.b16 %v126, %v116
    %v197 = vpack.c.b16 %v127, %v117
    %v198 = vpack.c.b16 %v138, %v128
    %v199 = vpack.c.b16 %v139, %v129
    %v200 = vpack.c.b16 %v140, %v130
    %v201 = vpack.c.b16 %v141, %v131
    %v202 = vpack.c.b16 %v142, %v132
    %v203 = vpack.c.b16 %v143, %v133
    %v204 = vpack.c.b16 %v144, %v134
    %v205 = vpack.c.b16 %v145, %v135
    %v206 = vpack.c.b16 %v146, %v136
    %v207 = vpack.c.b16 %v147, %v137
    %v208 = vpack.c.b16 %v158, %v148
    %v209 = vpack.c.b16 %v159, %v149
    %v210 = vpack.c.b16 %v160, %v150
    %v211 = vpack.c.b16 %v161, %v151
    %v212 = vpack.c.b16 %v162, %v152
    %v213 = vpack.c.b16 %v163, %v153
    %v214 = vpack.c.b16 %v164, %v154
    %v215 = vpack.c.b16 %v165, %v155
    %v216 = vpack.c.b16 %v166, %v156
    %v217 = vpack.c.b16 %v167, %v157
    %v218 = vpack.c.b16 %v178, %v168
    %v219 = vpack.c.b16 %v179, %v169
    %v220 = vpack.c.b16 %v180, %v170
    %v221 = vpack.c.b16 %v181, %v171
    %v222 = vpack.c.b16 %v182, %v172
    %v223 = vpack.c.b16 %v183, %v173
    %v224 = vpack.c.b16 %v184, %v174
    %v225 = vpack.c.b16 %v185, %v175
    %v226 = vpack.c.b16 %v186, %v176
    %v227 = vpack.c.b16 %v187, %v177
    %vm268 = vcmask 523264
    %v270 = vsel %vm268, %v27, 0
    %272 = vmatprep.subr.bf16.mxu0 %v189
    %273 = vmatpush1.bf16.msra.mxu0 %v188
    %274 = vmatprep.subr.bf16.mxu0 %v199
    %275 = vmatpush1.bf16.msra.mxu0 %v198
    %276 = vmatprep.subr.bf16.mxu0 %v209
    %277 = vmatpush1.bf16.msra.mxu0 %v208
    %278 = vmatprep.subr.bf16.mxu0 %v219
    %279 = vmatpush1.bf16.msra.mxu0 %v218
    %280 = vmatprep.subr.bf16.mxu0 0
    %281 = vmatpush1.bf16.msra.mxu0 0
    %282 = vmatprep.subr.bf16.mxu0 0
    %283 = vmatpush1.bf16.msra.mxu0 0
    %284 = vmatprep.subr.bf16.mxu0 0
    %285 = vmatpush1.bf16.msra.mxu0 0
    %286 = vmatprep.subr.bf16.mxu0 0
    %287 = vmatpush1.bf16.msra.mxu0 0
    %288 = vmatprep.subr.bf16.mxu0 0
    %289 = vmatpush1.bf16.msra.mxu0 0
    %290 = vmatprep.subr.bf16.mxu0 0
    %291 = vmatpush1.bf16.msra.mxu0 0
    %292 = vmatprep.subr.bf16.mxu0 0
    %293 = vmatpush1.bf16.msra.mxu0 0
    %294 = vmatprep.subr.bf16.mxu0 0
    %295 = vmatpush1.bf16.msra.mxu0 0
    %296 = vmatprep.subr.bf16.mxu0 0
    %297 = vmatpush1.bf16.msra.mxu0 0
    %298 = vmatprep.subr.bf16.mxu0 0
    %299 = vmatpush1.bf16.msra.mxu0 0
    %300 = vmatprep.subr.bf16.mxu0 0
    %301 = vmatpush1.bf16.msra.mxu0 0
    %302 = vmatprep.subr.bf16.mxu0 0
    %303 = vmatpush1.bf16.msra.mxu0 0
    %304 = vmatprep.mubr.bf16.mxu0 0
    %305 = vmatmul.mubr.bf16.gmra.mrb[0].mxu0 %v270
    %v306 = vpop.f32.mrb[0].mxu0
    %v307 = vadd.f32 0.0, %v306
    %v308 = vpop.f32.mrb[0].mxu0
    %v309 = vadd.f32 0.0, %v308
    %v310 = vpop.f32.mrb[0].mxu0
    %v311 = vpop.f32.mrb[0].mxu0
    %312 = vdwg.mxu0
    %313 = vmatprep.subr.bf16.mxu0 %v191
    %314 = vmatpush1.bf16.msra.mxu0 %v190
    %315 = vmatprep.subr.bf16.mxu0 %v201
    %316 = vmatpush1.bf16.msra.mxu0 %v200
    %317 = vmatprep.subr.bf16.mxu0 %v211
    %318 = vmatpush1.bf16.msra.mxu0 %v210
    %319 = vmatprep.subr.bf16.mxu0 %v221
    %320 = vmatpush1.bf16.msra.mxu0 %v220
    %321 = vmatprep.subr.bf16.mxu0 0
    %322 = vmatpush1.bf16.msra.mxu0 0
    %323 = vmatprep.subr.bf16.mxu0 0
    %324 = vmatpush1.bf16.msra.mxu0 0
    %325 = vmatprep.subr.bf16.mxu0 0
    %326 = vmatpush1.bf16.msra.mxu0 0
    %327 = vmatprep.subr.bf16.mxu0 0
    %328 = vmatpush1.bf16.msra.mxu0 0
    %329 = vmatprep.subr.bf16.mxu0 0
    %330 = vmatpush1.bf16.msra.mxu0 0
    %331 = vmatprep.subr.bf16.mxu0 0
    %332 = vmatpush1.bf16.msra.mxu0 0
    %333 = vmatprep.subr.bf16.mxu0 0
    %334 = vmatpush1.bf16.msra.mxu0 0
    %335 = vmatprep.subr.bf16.mxu0 0
    %336 = vmatpush1.bf16.msra.mxu0 0
    %337 = vmatprep.subr.bf16.mxu0 0
    %338 = vmatpush1.bf16.msra.mxu0 0
    %339 = vmatprep.subr.bf16.mxu0 0
    %340 = vmatpush1.bf16.msra.mxu0 0
    %341 = vmatprep.subr.bf16.mxu0 0
    %342 = vmatpush1.bf16.msra.mxu0 0
    %343 = vmatprep.subr.bf16.mxu0 0
    %344 = vmatpush1.bf16.msra.mxu0 0
    %345 = vmatprep.mubr.bf16.mxu0 0
    %346 = vmatmul.mubr.bf16.gmra.mrb[0].mxu0 %v270
    %v347 = vpop.f32.mrb[0].mxu0
    %v348 = vadd.f32 0.0, %v347
    %v349 = vpop.f32.mrb[0].mxu0
    %v350 = vadd.f32 0.0, %v349
    %v351 = vpop.f32.mrb[0].mxu0
    %v352 = vpop.f32.mrb[0].mxu0
    %353 = vdwg.mxu0
    %354 = vmatprep.subr.bf16.mxu0 %v193
    %355 = vmatpush1.bf16.msra.mxu0 %v192
    %356 = vmatprep.subr.bf16.mxu0 %v203
    %357 = vmatpush1.bf16.msra.mxu0 %v202
    %358 = vmatprep.subr.bf16.mxu0 %v213
    %359 = vmatpush1.bf16.msra.mxu0 %v212
    %360 = vmatprep.subr.bf16.mxu0 %v223
    %361 = vmatpush1.bf16.msra.mxu0 %v222
    %362 = vmatprep.subr.bf16.mxu0 0
    %363 = vmatpush1.bf16.msra.mxu0 0
    %364 = vmatprep.subr.bf16.mxu0 0
    %365 = vmatpush1.bf16.msra.mxu0 0
    %366 = vmatprep.subr.bf16.mxu0 0
    %367 = vmatpush1.bf16.msra.mxu0 0
    %368 = vmatprep.subr.bf16.mxu0 0
    %369 = vmatpush1.bf16.msra.mxu0 0
    %370 = vmatprep.subr.bf16.mxu0 0
    %371 = vmatpush1.bf16.msra.mxu0 0
    %372 = vmatprep.subr.bf16.mxu0 0
    %373 = vmatpush1.bf16.msra.mxu0 0
    %374 = vmatprep.subr.bf16.mxu0 0
    %375 = vmatpush1.bf16.msra.mxu0 0
    %376 = vmatprep.subr.bf16.mxu0 0
    %377 = vmatpush1.bf16.msra.mxu0 0
    %378 = vmatprep.subr.bf16.mxu0 0
    %379 = vmatpush1.bf16.msra.mxu0 0
    %380 = vmatprep.subr.bf16.mxu0 0
    %381 = vmatpush1.bf16.msra.mxu0 0
    %382 = vmatprep.subr.bf16.mxu0 0
    %383 = vmatpush1.bf16.msra.mxu0 0
    %384 = vmatprep.subr.bf16.mxu0 0
    %385 = vmatpush1.bf16.msra.mxu0 0
    %386 = vmatprep.mubr.bf16.mxu0 0
    %387 = vmatmul.mubr.bf16.gmra.mrb[0].mxu0 %v270
    %v388 = vpop.f32.mrb[0].mxu0
    %v389 = vadd.f32 0.0, %v388
    %v390 = vpop.f32.mrb[0].mxu0
    %v391 = vadd.f32 0.0, %v390
    %v392 = vpop.f32.mrb[0].mxu0
    %v393 = vpop.f32.mrb[0].mxu0
    %394 = vdwg.mxu0
    %395 = vmatprep.subr.bf16.mxu0 %v195
    %396 = vmatpush1.bf16.msra.mxu0 %v194
    %397 = vmatprep.subr.bf16.mxu0 %v205
    %398 = vmatpush1.bf16.msra.mxu0 %v204
    %399 = vmatprep.subr.bf16.mxu0 %v215
    %400 = vmatpush1.bf16.msra.mxu0 %v214
    %401 = vmatprep.subr.bf16.mxu0 %v225
    %402 = vmatpush1.bf16.msra.mxu0 %v224
    %403 = vmatprep.subr.bf16.mxu0 0
    %404 = vmatpush1.bf16.msra.mxu0 0
    %405 = vmatprep.subr.bf16.mxu0 0
    %406 = vmatpush1.bf16.msra.mxu0 0
    %407 = vmatprep.subr.bf16.mxu0 0
    %408 = vmatpush1.bf16.msra.mxu0 0
    %409 = vmatprep.subr.bf16.mxu0 0
    %410 = vmatpush1.bf16.msra.mxu0 0
    %411 = vmatprep.subr.bf16.mxu0 0
    %412 = vmatpush1.bf16.msra.mxu0 0
    %413 = vmatprep.subr.bf16.mxu0 0
    %414 = vmatpush1.bf16.msra.mxu0 0
    %415 = vmatprep.subr.bf16.mxu0 0
    %416 = vmatpush1.bf16.msra.mxu0 0
    %417 = vmatprep.subr.bf16.mxu0 0
    %418 = vmatpush1.bf16.msra.mxu0 0
    %419 = vmatprep.subr.bf16.mxu0 0
    %420 = vmatpush1.bf16.msra.mxu0 0
    %421 = vmatprep.subr.bf16.mxu0 0
    %422 = vmatpush1.bf16.msra.mxu0 0
    %423 = vmatprep.subr.bf16.mxu0 0
    %424 = vmatpush1.bf16.msra.mxu0 0
    %425 = vmatprep.subr.bf16.mxu0 0
    %426 = vmatpush1.bf16.msra.mxu0 0
    %427 = vmatprep.mubr.bf16.mxu0 0
    %428 = vmatmul.mubr.bf16.gmra.mrb[0].mxu0 %v270
    %v429 = vpop.f32.mrb[0].mxu0
    %v430 = vadd.f32 0.0, %v429
    %v431 = vpop.f32.mrb[0].mxu0
    %v432 = vadd.f32 0.0, %v431
    %v433 = vpop.f32.mrb[0].mxu0
    %v434 = vpop.f32.mrb[0].mxu0
    %435 = vdwg.mxu0
    %436 = vmatprep.subr.bf16.mxu0 %v197
    %437 = vmatpush1.bf16.msra.mxu0 %v196
    %438 = vmatprep.subr.bf16.mxu0 %v207
    %439 = vmatpush1.bf16.msra.mxu0 %v206
    %440 = vmatprep.subr.bf16.mxu0 %v217
    %441 = vmatpush1.bf16.msra.mxu0 %v216
    %442 = vmatprep.subr.bf16.mxu0 %v227
    %443 = vmatpush1.bf16.msra.mxu0 %v226
    %444 = vmatprep.subr.bf16.mxu0 0
    %445 = vmatpush1.bf16.msra.mxu0 0
    %446 = vmatprep.subr.bf16.mxu0 0
    %447 = vmatpush1.bf16.msra.mxu0 0
    %448 = vmatprep.subr.bf16.mxu0 0
    %449 = vmatpush1.bf16.msra.mxu0 0
    %450 = vmatprep.subr.bf16.mxu0 0
    %451 = vmatpush1.bf16.msra.mxu0 0
    %452 = vmatprep.subr.bf16.mxu0 0
    %453 = vmatpush1.bf16.msra.mxu0 0
    %454 = vmatprep.subr.bf16.mxu0 0
    %455 = vmatpush1.bf16.msra.mxu0 0
    %456 = vmatprep.subr.bf16.mxu0 0
    %457 = vmatpush1.bf16.msra.mxu0 0
    %458 = vmatprep.subr.bf16.mxu0 0
    %459 = vmatpush1.bf16.msra.mxu0 0
    %460 = vmatprep.subr.bf16.mxu0 0
    %461 = vmatpush1.bf16.msra.mxu0 0
    %462 = vmatprep.subr.bf16.mxu0 0
    %463 = vmatpush1.bf16.msra.mxu0 0
    %464 = vmatprep.subr.bf16.mxu0 0
    %465 = vmatpush1.bf16.msra.mxu0 0
    %466 = vmatprep.subr.bf16.mxu0 0
    %467 = vmatpush1.bf16.msra.mxu0 0
    %468 = vmatprep.mubr.bf16.mxu0 0
    %469 = vmatmul.mubr.bf16.gmra.mrb[0].mxu0 %v270
    %v470 = vpop.f32.mrb[0].mxu0
    %v471 = vadd.f32 0.0, %v470
    %v472 = vpop.f32.mrb[0].mxu0
    %v473 = vadd.f32 0.0, %v472
    %v474 = vpop.f32.mrb[0].mxu0
    %v475 = vpop.f32.mrb[0].mxu0
    %476 = vdwg.mxu0
    %v477 = vxor.u32 %v307, 2147483648
    %v478 = vxor.u32 %v309, 2147483648
    %v479 = vxor.u32 %v348, 2147483648
    %v480 = vxor.u32 %v350, 2147483648
    %v481 = vxor.u32 %v389, 2147483648
    %v482 = vxor.u32 %v391, 2147483648
    %v483 = vxor.u32 %v430, 2147483648
    %v484 = vxor.u32 %v432, 2147483648
    %v485 = vxor.u32 %v471, 2147483648
    %v486 = vxor.u32 %v473, 2147483648
    %v487 = vmul.f32 %v477, 1.442695
    %v488 = vpow.pop %v487
    %v489 = vmul.f32 %v478, 1.442695
    %v490 = vpow.pop %v489
    %v491 = vmul.f32 %v479, 1.442695
    %v492 = vpow.pop %v491
    %v493 = vmul.f32 %v480, 1.442695
    %v494 = vpow.pop %v493
    %v495 = vmul.f32 %v481, 1.442695
    %v496 = vpow.pop %v495
    %v497 = vmul.f32 %v482, 1.442695
    %v498 = vpow.pop %v497
    %v499 = vmul.f32 %v483, 1.442695
    %v500 = vpow.pop %v499
    %v501 = vmul.f32 %v484, 1.442695
    %v502 = vpow.pop %v501
    %v503 = vmul.f32 %v485, 1.442695
    %v504 = vpow.pop %v503
    %v505 = vmul.f32 %v486, 1.442695
    %v506 = vpow.pop %v505
    %v507 = vadd.f32 %v488, 1.0
    %v508 = vadd.f32 %v490, 1.0
    %v509 = vadd.f32 %v492, 1.0
    %v510 = vadd.f32 %v494, 1.0
    %v511 = vadd.f32 %v496, 1.0
    %v512 = vadd.f32 %v498, 1.0
    %v513 = vadd.f32 %v500, 1.0
    %v514 = vadd.f32 %v502, 1.0
    %v515 = vadd.f32 %v504, 1.0
    %v516 = vadd.f32 %v506, 1.0
    %v517 = vrcp.pop %v507
    %v518 = vmul.f32 1.0, %v517
    %v519 = vrcp.pop %v508
    %v520 = vmul.f32 1.0, %v519
    %v521 = vrcp.pop %v509
    %v522 = vmul.f32 1.0, %v521
    %v523 = vrcp.pop %v510
    %v524 = vmul.f32 1.0, %v523
    %v525 = vrcp.pop %v511
    %v526 = vmul.f32 1.0, %v525
    %v527 = vrcp.pop %v512
    %v528 = vmul.f32 1.0, %v527
    %v529 = vrcp.pop %v513
    %v530 = vmul.f32 1.0, %v529
    %v531 = vrcp.pop %v514
    %v532 = vmul.f32 1.0, %v531
    %v533 = vrcp.pop %v515
    %v534 = vmul.f32 1.0, %v533
    %v535 = vrcp.pop %v516
    %v536 = vmul.f32 1.0, %v535
    %537 = vst [vmem:[#allocation5] sm:$0xff] %v518
    %538 = vst [vmem:[#allocation5 + $0x8] sm:$0xff] %v520
    %539 = vst [vmem:[#allocation5 + $0x10] sm:$0xff] %v522
    %540 = vst [vmem:[#allocation5 + $0x18] sm:$0xff] %v524
    %541 = vst [vmem:[#allocation5 + $0x20] sm:$0xff] %v526
    %542 = vst [vmem:[#allocation5 + $0x28] sm:$0xff] %v528
    %543 = vst [vmem:[#allocation5 + $0x30] sm:$0xff] %v530
    %544 = vst [vmem:[#allocation5 + $0x38] sm:$0xff] %v532
    %545 = vst [vmem:[#allocation5 + $0x40] sm:$0xff] %v534
    %vm546 = vcmask 801792
    %547 = vst.msk [vmem:[#allocation5 + $0x48] sm:$0xff] %vm546, %v536
    // Predicated region
    $region14: #{simple1nn_forward.1} parent=1 // pred_check
      _
    $region15: #{simple1nn_forward.1} parent=1 // pred_check_branch
      %549 = sbr.rel (0) target = $region17
    $region16: #{simple1nn_forward.1} parent=1 // pred_region
      %s551 = ssub.s32 1280, 1280
      %552 = vsyncadd [#allocation4], %s551
      %s554 = sshll.u32 [#allocation5], 4
      %s555 = int_to_ptr.vmem [resolvable:$true] %s554
      %557 = dma.vmem_to_hbm [thread:$0]  %s555, 1280, %s2, [#allocation4]
    $region17: #{simple1nn_forward.1} parent=1 // pred_fallthru
      _
    // Predicated region
    $region18: #{simple1nn_forward.1} parent=1 // pred_check
      _
    $region19: #{simple1nn_forward.1} parent=1 // pred_check_branch
      %559 = sbr.rel (0) target = $region21
    $region20: #{simple1nn_forward.1} parent=1 // pred_region
      %560 = dma.done [#allocation4], 1280
    $region21: #{simple1nn_forward.1} parent=1 // pred_fallthru
      _
    %561 = vsyncpa [#allocation3], 1
    %562 = vsyncpa [#allocation4], 1

</llo_original>
